<compile_context>
chip_gen: v7x
topology: tpu7x:2x2x1
jax: 0.10.0
libtpu: 0.0.40
codegen_flags: <defaults>
</compile_context>

<pallas_src>
import math

import jax
import jax.numpy as jnp
from jax import lax
from jax.experimental import pallas as pl
from jax.experimental.pallas import tpu as pltpu


def _round_up(x, m):
    return (x + m - 1) // m * m


# ----------------------------------------------------------------------------
# Kernel
# ----------------------------------------------------------------------------
def decoder_kernel(circ_idx_ref, dis_idx_ref, circ_tab_ref, dis_tab_ref,
                   wr_ref, wce_ref, out_ref):
    tb = circ_idx_ref.shape[0]
    D = circ_tab_ref.shape[1]
    WD = wr_ref.shape[1]
    W = WD // D

    def gather_rows(tab_ref, idx_col):
        # One-hot MXU gather: exact (each output row is value * 1.0), fully
        # lowerable (iota / compare / dot), and rides the otherwise-idle MXU
        # in this memory-bound kernel.
        # TODO(synk): for embedding tables too large to keep VMEM-resident,
        # switch to a manual DMA gather (memory_space=pl.ANY + make_async_copy).
        n = tab_ref.shape[0]
        sel = lax.broadcasted_iota(jnp.int32, (tb, n), 1) == idx_col
        onehot = sel.astype(tab_ref.dtype)
        return jnp.dot(onehot, tab_ref[...], preferred_element_type=jnp.float32)

    circ = gather_rows(circ_tab_ref, circ_idx_ref[...])   # [tb, D] f32
    dis = gather_rows(dis_tab_ref, dis_idx_ref[...])      # [tb, D] f32

    # Stage 1 (MXU): t[b, w*D+e] = sum_d circ[b, d] * weight[w, d, e].
    t = jnp.dot(circ.astype(wr_ref.dtype), wr_ref[...],
                preferred_element_type=jnp.float32)        # [tb, W*D] f32

    # Stage 2 (VPU, f32): scale each basis block by dis with static,
    # lane-aligned slices (D is a multiple of 128) — no W-tiled dis stream.
    scaled = jnp.concatenate(
        [t[:, w * D:(w + 1) * D] * dis for w in range(W)], axis=1)

    # Stage 3 (MXU, f32): per-basis reduction + classifier folded into one
    # [tb, W*D] @ [W*D, C] matmul.  wce is kept f32 so the 256-term reduction
    # input is never rounded to bf16 (accuracy fix from review).
    out = jnp.dot(scaled, wce_ref[...], preferred_element_type=jnp.float32)
    out_ref[...] = jnp.maximum(out, 0.0).astype(out_ref.dtype)


# ----------------------------------------------------------------------------
# Host-side helpers
# ----------------------------------------------------------------------------
def prepare_decoder_params(weight, weight_classifier, compute_dtype=jnp.float32):
    """Precompute kernel-friendly weight layouts once (not per forward call)."""
    W, D, _ = weight.shape
    # weight_r[d, w*D+e] = weight[w, d, e]
    weight_r = jnp.transpose(weight, (1, 0, 2)).reshape(D, W * D).astype(compute_dtype)
    # wc_exp[w*D+e, c] = weight_classifier[w, c]; tiny + resident -> keep f32.
    wc_exp = jnp.repeat(weight_classifier.astype(jnp.float32), D, axis=0)
    return weight_r, wc_exp


def _choose_batch_tile(B, batch_tile, min_grid_steps=2):
    # Bigger tiles amortize the ~0.35us per-grid-step overhead; choose tb so
    # padding is minimal, and keep >=2 grid steps when B allows so the
    # "parallel" batch axis can shard across v7x's two TensorCores.
    n_steps = max(pl.cdiv(B, max(batch_tile, 8)), 1)
    if B > 8:
        n_steps = max(n_steps, min_grid_steps)
    tb = _round_up(pl.cdiv(B, n_steps), 8)
    B_pad = _round_up(B, tb)
    return tb, B_pad


def _vmem_limit_bytes(tb, D, W, C, n_circ, n_dis, compute_itemsize):
    lane = lambda n: _round_up(max(int(n), 1), 128)
    sub = lambda n: _round_up(max(int(n), 1), 8)
    f32 = 4
    # The pipeline double-buffers every operand (including constant-index-map
    # "resident" blocks), and VMEM tiles are (8, 128)-padded.
    bufs = 2 * (
        2 * sub(tb) * lane(1) * 4                        # circ_idx + dis_idx
        + sub(n_circ) * lane(D) * compute_itemsize       # circ table
        + sub(n_dis) * lane(D) * compute_itemsize        # dis table
        + sub(D) * lane(W * D) * compute_itemsize        # weight_r
        + sub(W * D) * lane(C) * f32                     # wc_exp (f32)
        + sub(tb) * lane(C) * f32)                       # output block
    # In-kernel f32 intermediates: one-hot selectors, gathered rows, t, scaled.
    interm = sub(tb) * (lane(n_circ) + lane(n_dis) + 2 * lane(D)
                        + 2 * lane(W * D)) * f32
    want = bufs + interm + (4 << 20)                     # compiler-temp slack
    try:
        cap = int(pltpu.get_tpu_info().vmem_capacity_bytes)
    except Exception:
        cap = 64 << 20                                   # v7x-safe fallback
    cap = max(cap - (16 << 20), 16 << 20)                # headroom below physical
    return int(min(max(want, 16 << 20), cap))


def decoder_forward(circ_inputs, dis_inputs, circ_indices, dis_indices,
                    weight=None, weight_classifier=None, *, prepared=None,
                    compute_dtype=jnp.float32, batch_tile=1024):
    if prepared is None:
        prepared = prepare_decoder_params(weight, weight_classifier, compute_dtype)
    weight_r, wc_exp = prepared
    D, WD = weight_r.shape
    W = WD // D
    C = wc_exp.shape[1]

    # Embedding tables stay resident in VMEM; gather happens in-kernel.
    circ_tab = circ_inputs.astype(compute_dtype)          # [Nc, D]
    dis_tab = dis_inputs.astype(compute_dtype)            # [Nd, D]
    n_circ, n_dis = circ_tab.shape[0], dis_tab.shape[0]

    circ_idx = jnp.asarray(circ_indices, jnp.int32)
    dis_idx = jnp.asarray(dis_indices, jnp.int32)
    B = circ_idx.shape[0]

    tb, B_pad = _choose_batch_tile(B, batch_tile)
    if B_pad != B:
        # Padded rows gather row 0; their outputs are sliced off below.
        circ_idx = jnp.pad(circ_idx, (0, B_pad - B))
        dis_idx = jnp.pad(dis_idx, (0, B_pad - B))
    circ_idx = circ_idx.reshape(B_pad, 1)
    dis_idx = dis_idx.reshape(B_pad, 1)

    itemsize = jnp.dtype(compute_dtype).itemsize
    vmem_limit = _vmem_limit_bytes(tb, D, W, C, n_circ, n_dis, itemsize)

    out = pl.pallas_call(
        decoder_kernel,
        out_shape=jax.ShapeDtypeStruct((B_pad, C), jnp.float32),
        grid_spec=pltpu.PrefetchScalarGridSpec(
            num_scalar_prefetch=0,
            grid=(B_pad // tb,),
            in_specs=[
                pl.BlockSpec((tb, 1), lambda i: (i, 0)),          # circ indices
                pl.BlockSpec((tb, 1), lambda i: (i, 0)),          # dis indices
                pl.BlockSpec((n_circ, D), lambda i: (0, 0)),      # circ table (resident)
                pl.BlockSpec((n_dis, D), lambda i: (0, 0)),       # dis table (resident)
                pl.BlockSpec((D, WD), lambda i: (0, 0)),          # weight_r (resident)
                pl.BlockSpec((WD, C), lambda i: (0, 0)),          # classifier (resident, f32)
            ],
            out_specs=pl.BlockSpec((tb, C), lambda i: (i, 0)),
        ),
        compiler_params=pltpu.CompilerParams(
            dimension_semantics=("parallel",),
            vmem_limit_bytes=vmem_limit,
        ),
    )(circ_idx, dis_idx, circ_tab, dis_tab, weight_r, wc_exp)
    return out[:B]


# ----------------------------------------------------------------------------
# Test utilities
# ----------------------------------------------------------------------------
def kaiming_uniform(key, shape):
    # PyTorch kaiming_uniform_ (a=0): bound = sqrt(6 / fan_in)
    if len(shape) > 2:
        fan_in = shape[1] * math.prod(shape[2:])
    else:
        fan_in = shape[1]
    bound = math.sqrt(6.0 / fan_in)
    return jax.random.uniform(key, shape, jnp.float32, -bound, bound)


def reference_forward(circ_inputs, dis_inputs, circ_indices, dis_indices,
                      weight, weight_classifier):
    circ = circ_inputs[circ_indices]
    dis = dis_inputs[dis_indices]
    basis = jnp.einsum('bd,wde,be->bw', circ, weight, dis,
                       precision=jax.lax.Precision.HIGHEST)
    return jax.nn.relu(jnp.dot(basis, weight_classifier,
                               precision=jax.lax.Precision.HIGHEST))


if __name__ == "__main__":
    key = jax.random.PRNGKey(0)
    k_circ, k_dis, k_w, k_wc, k_ci, k_di = jax.random.split(key, 6)

    # Shapes consistent with CDA: self.decoder = Decoder(128, 2, 2)
    input_dim = 128     # D
    num_weights = 2     # W
    num_classes = 2     # C
    n_circ, n_dis = 64, 32
    batch = 20          # exercises batch padding and a 2-step grid

    circ_inputs = jax.random.normal(k_circ, (n_circ, input_dim), jnp.float32)
    dis_inputs = jax.random.normal(k_dis, (n_dis, input_dim), jnp.float32)
    circ_indices = jax.random.randint(k_ci, (batch,), 0, n_circ)
    dis_indices = jax.random.randint(k_di, (batch,), 0, n_dis)

    weight = kaiming_uniform(k_w, (num_weights, input_dim, input_dim))
    weight_classifier = kaiming_uniform(k_wc, (num_weights, num_classes))

    ref = reference_forward(circ_inputs, dis_inputs, circ_indices, dis_indices,
                            weight, weight_classifier)

    # f32 path (matches the PyTorch module numerics).
    params_f32 = prepare_decoder_params(weight, weight_classifier, jnp.float32)
    out = decoder_forward(circ_inputs, dis_inputs, circ_indices, dis_indices,
                          prepared=params_f32, compute_dtype=jnp.float32)
    out = jax.block_until_ready(out)
    assert out.shape == (batch, num_classes)
    assert jnp.allclose(out, ref, atol=1e-3, rtol=1e-3)

    # bf16 fast path: only streamed/resident tables + weight_r are bf16;
    # Stage 2 / Stage 3 stay f32, so accuracy is close to the f32 path.
    params_bf16 = prepare_decoder_params(weight, weight_classifier, jnp.bfloat16)
    out_bf16 = decoder_forward(circ_inputs, dis_inputs, circ_indices,
                               dis_indices, prepared=params_bf16,
                               compute_dtype=jnp.bfloat16)
    out_bf16 = jax.block_until_ready(out_bf16)
    assert out_bf16.shape == (batch, num_classes)
    assert bool(jnp.all(jnp.isfinite(out_bf16)))
    assert jnp.allclose(out_bf16, ref, atol=0.5, rtol=0.05)

    print("KERNEL_OK")
</pallas_src>

<mosaic_0001>
module attributes {stable_mosaic.version = 11 : i64} {
  func.func @decoder_kernel(%arg0: i32, %arg1: memref<16x1xi32, #tpu.memory_space<vmem>>, %arg2: memref<16x1xi32, #tpu.memory_space<vmem>>, %arg3: memref<64x128xf32, #tpu.memory_space<vmem>>, %arg4: memref<32x128xf32, #tpu.memory_space<vmem>>, %arg5: memref<128x256xf32, #tpu.memory_space<vmem>>, %arg6: memref<256x2xf32, #tpu.memory_space<vmem>>, %arg7: memref<16x2xf32, #tpu.memory_space<vmem>>) attributes {dimension_semantics = [#tpu.dimension_semantics<parallel>], iteration_bounds = array<i64: 2>, scalar_prefetch = 0 : i64, scratch_operands = 0 : i64, tpu.core_type = #tpu.core_type<tc>, window_params = [{transform_indices = @transform_0, window_bounds = array<i64: 16, 1>}, {transform_indices = @transform_1, window_bounds = array<i64: 16, 1>}, {pipeline_mode = #tpu.pipeline_mode<synchronous>, transform_indices = @transform_2, window_bounds = array<i64: 64, 128>}, {pipeline_mode = #tpu.pipeline_mode<synchronous>, transform_indices = @transform_3, window_bounds = array<i64: 32, 128>}, {pipeline_mode = #tpu.pipeline_mode<synchronous>, transform_indices = @transform_4, window_bounds = array<i64: 128, 256>}, {pipeline_mode = #tpu.pipeline_mode<synchronous>, transform_indices = @transform_5, window_bounds = array<i64: 256, 2>}, {transform_indices = @transform_6, window_bounds = array<i64: 16, 2>}]} {
    %c0 = arith.constant 0 : index
    %c0_0 = arith.constant 0 : index
    %0 = vector.load %arg1[%c0, %c0_0] : memref<16x1xi32, #tpu.memory_space<vmem>>, vector<16x1xi32>
    %1 = tpu.iota {dimensions = array<i32: 1>} : vector<16x64xi32>
    %2 = vector.broadcast %0 : vector<16x1xi32> to vector<16x64xi32>
    %3 = arith.cmpi eq, %1, %2 : vector<16x64xi32>
    %4 = arith.extui %3 : vector<16x64xi1> to vector<16x64xi32>
    %5 = arith.sitofp %4 : vector<16x64xi32> to vector<16x64xf32>
    %c0_1 = arith.constant 0 : index
    %c0_2 = arith.constant 0 : index
    %6 = vector.load %arg3[%c0_1, %c0_2] : memref<64x128xf32, #tpu.memory_space<vmem>>, vector<64x128xf32>
    %cst = arith.constant dense<0.000000e+00> : vector<16x128xf32>
    %7 = tpu.matmul %5, %6, %cst {dimension_numbers = #tpu.dot_dimension_numbers<[1], [0], [0], [1], [0, 0, 1, 1], [], []>} : vector<16x64xf32>, vector<64x128xf32>, vector<16x128xf32> -> vector<16x128xf32>
    %c0_3 = arith.constant 0 : index
    %c0_4 = arith.constant 0 : index
    %8 = vector.load %arg2[%c0_3, %c0_4] : memref<16x1xi32, #tpu.memory_space<vmem>>, vector<16x1xi32>
    %9 = tpu.iota {dimensions = array<i32: 1>} : vector<16x32xi32>
    %10 = vector.broadcast %8 : vector<16x1xi32> to vector<16x32xi32>
    %11 = arith.cmpi eq, %9, %10 : vector<16x32xi32>
    %12 = arith.extui %11 : vector<16x32xi1> to vector<16x32xi32>
    %13 = arith.sitofp %12 : vector<16x32xi32> to vector<16x32xf32>
    %c0_5 = arith.constant 0 : index
    %c0_6 = arith.constant 0 : index
    %14 = vector.load %arg4[%c0_5, %c0_6] : memref<32x128xf32, #tpu.memory_space<vmem>>, vector<32x128xf32>
    %cst_7 = arith.constant dense<0.000000e+00> : vector<16x128xf32>
    %15 = tpu.matmul %13, %14, %cst_7 {dimension_numbers = #tpu.dot_dimension_numbers<[1], [0], [0], [1], [0, 0, 1, 1], [], []>} : vector<16x32xf32>, vector<32x128xf32>, vector<16x128xf32> -> vector<16x128xf32>
    %c0_8 = arith.constant 0 : index
    %c0_9 = arith.constant 0 : index
    %16 = vector.load %arg5[%c0_8, %c0_9] : memref<128x256xf32, #tpu.memory_space<vmem>>, vector<128x256xf32>
    %cst_10 = arith.constant dense<0.000000e+00> : vector<16x256xf32>
    %17 = tpu.matmul %7, %16, %cst_10 {dimension_numbers = #tpu.dot_dimension_numbers<[1], [0], [0], [1], [0, 0, 1, 1], [], []>} : vector<16x128xf32>, vector<128x256xf32>, vector<16x256xf32> -> vector<16x256xf32>
    %18 = vector.extract_strided_slice %17 {offsets = [0, 0], sizes = [16, 128], strides = [1, 1]} : vector<16x256xf32> to vector<16x128xf32>
    %19 = arith.mulf %18, %15 : vector<16x128xf32>
    %20 = vector.extract_strided_slice %17 {offsets = [0, 128], sizes = [16, 128], strides = [1, 1]} : vector<16x256xf32> to vector<16x128xf32>
    %21 = arith.mulf %20, %15 : vector<16x128xf32>
    %22 = tpu.concatenate %19, %21 in 1 : vector<16x128xf32>, vector<16x128xf32> -> vector<16x256xf32>
    %c0_11 = arith.constant 0 : index
    %c0_12 = arith.constant 0 : index
    %23 = vector.load %arg6[%c0_11, %c0_12] : memref<256x2xf32, #tpu.memory_space<vmem>>, vector<256x2xf32>
    %cst_13 = arith.constant dense<0.000000e+00> : vector<16x2xf32>
    %24 = tpu.matmul %22, %23, %cst_13 {dimension_numbers = #tpu.dot_dimension_numbers<[1], [0], [0], [1], [0, 0, 1, 1], [], []>} : vector<16x256xf32>, vector<256x2xf32>, vector<16x2xf32> -> vector<16x2xf32>
    %cst_14 = arith.constant 0.000000e+00 : f32
    %25 = vector.broadcast %cst_14 : f32 to vector<16x2xf32>
    %26 = arith.maximumf %24, %25 : vector<16x2xf32>
    %c0_15 = arith.constant 0 : index
    %c0_16 = arith.constant 0 : index
    %27 = vector.load %arg7[%c0_15, %c0_16] : memref<16x2xf32, #tpu.memory_space<vmem>>, vector<16x2xf32>
    tpu.vector_store %arg7[%c0_15, %c0_16], %26 {strides = array<i32>} : memref<16x2xf32, #tpu.memory_space<vmem>>, vector<16x2xf32>,
    return
  }
  func.func @transform_0(%arg0: i32) -> (i32, i32) {
    %c0_i32 = arith.constant 0 : i32
    %c0_i32_0 = arith.constant 0 : i32
    return %arg0, %c0_i32 : i32, i32
  }
  func.func @transform_1(%arg0: i32) -> (i32, i32) {
    %c0_i32 = arith.constant 0 : i32
    %c0_i32_0 = arith.constant 0 : i32
    return %arg0, %c0_i32 : i32, i32
  }
  func.func @transform_2(%arg0: i32) -> (i32, i32) {
    %c0_i32 = arith.constant 0 : i32
    %c0_i32_0 = arith.constant 0 : i32
    %c0_i32_1 = arith.constant 0 : i32
    return %c0_i32, %c0_i32_0 : i32, i32
  }
  func.func @transform_3(%arg0: i32) -> (i32, i32) {
    %c0_i32 = arith.constant 0 : i32
    %c0_i32_0 = arith.constant 0 : i32
    %c0_i32_1 = arith.constant 0 : i32
    return %c0_i32, %c0_i32_0 : i32, i32
  }
  func.func @transform_4(%arg0: i32) -> (i32, i32) {
    %c0_i32 = arith.constant 0 : i32
    %c0_i32_0 = arith.constant 0 : i32
    %c0_i32_1 = arith.constant 0 : i32
    return %c0_i32, %c0_i32_0 : i32, i32
  }
  func.func @transform_5(%arg0: i32) -> (i32, i32) {
    %c0_i32 = arith.constant 0 : i32
    %c0_i32_0 = arith.constant 0 : i32
    %c0_i32_1 = arith.constant 0 : i32
    return %c0_i32, %c0_i32_0 : i32, i32
  }
  func.func @transform_6(%arg0: i32) -> (i32, i32) {
    %c0_i32 = arith.constant 0 : i32
    %c0_i32_0 = arith.constant 0 : i32
    return %arg0, %c0_i32 : i32, i32
  }
}

</mosaic_0001>

<llo_original>
// kernel: tpu_custom_call.1
$region0: #{tpu_custom_call.1}
  #allocation0 [shape = 'u32[]', space=smem, size = 0x4, offset = 0x4, fixed_abs, tag = 'smem constant byte address 0x4 - core index']
  #allocation1 [shape = 'u32[144,128]{1,0:T(1,128)}', space=vmem, size = 0x12000, scoped, tag = 'internal scratch']
  %s0 = inlined_call_operand.vmem [shape: s32[32,1], index: 0, kind: input, shape index: {}]
  %s1 = inlined_call_operand.vmem [shape: s32[32,1], index: 1, kind: input, shape index: {}]
  %s2 = inlined_call_operand.vmem [shape: f32[64,128], index: 2, kind: input, shape index: {}]
  %s3 = inlined_call_operand.hbm [shape: f32[32,128], index: 3, kind: input, shape index: {}]
  %s4 = inlined_call_operand.vmem [shape: f32[128,256], index: 4, kind: input, shape index: {}]
  %s5 = inlined_call_operand.vmem [shape: f32[256,2], index: 5, kind: input, shape index: {}]
  %s6 = inlined_call_operand.vmem [shape: f32[32,2], index: 6, kind: output, shape index: {}]
  %s7 = sld [smem:[#allocation0]]
  $region61: #{tpu_custom_call.1} parent=0
    _
  %s9 = ssub.s32 1, %s7
  %s10 = scalar_select 0, %s9, %s7
  $region1: #{tpu_custom_call.1} parent=0
    #allocation2 [shape = 'u8[16384]{0}', space=vmem, size = 0x4000, scoped, tag = 'input window, operand 3, single buffered']
    #allocation3 [shape = 's32[2]{0}', space=sflag, size = 0x8, scoped, tag = 'scoped memory for tpu_custom_call.1']
    %11 = vsyncpa [#allocation3], 0
    loop: start=0, step=1, limit=4
    $region2: #{tpu_custom_call.1} parent=1 // loop_pre_header
      _
    $region3: #{tpu_custom_call.1} parent=1 // loop_header
      %s13 = sphi 0, %s17
      %p14 = scmp.ge.s32.totalorder %s13, 4
      %s23 = sphi 0, %s25
      %s26 = sphi 0, %s23
      %s27 = sphi 0, %s26
      %s43 = sphi 0, %s27
      %s49 = sphi 0, %s51
      %s52 = sphi 0, %s49
      %s53 = sphi 0, %s52
      %s69 = sphi 0, %s53
      %s73 = sphi 0, %s73
      %s75 = sphi 0, %s73
      %s76 = sphi 0, %s75
      %s90 = sphi 0, %s76
      %s94 = sphi 0, %s94
      %s96 = sphi 0, %s94
      %s97 = sphi 0, %s96
      %s111 = sphi 0, %s97
      %s115 = sphi 0, %s115
      %s117 = sphi 0, %s115
      %s118 = sphi 0, %s117
      %s132 = sphi 0, %s118
      %s136 = sphi 0, %s136
      %s138 = sphi 0, %s136
      %s139 = sphi 0, %s138
      %s153 = sphi 0, %s139
      %s159 = sphi 0, %s161
      %s162 = sphi 0, %s159
      %s163 = sphi 0, %s162
      %s179 = sphi 0, %s163
    $region4: #{tpu_custom_call.1} parent=1 // loop_header_branch
      %16 = sbr.rel (%p14) target = $region8
    $region5: #{tpu_custom_call.1} parent=1 // loop_body
      %s18 = ssub.s32 %s13, 1
      %s19 = ssub.s32 %s13, 2
      %s20 = sadd.s32 %s13, 1
      %s21 = ssub.s32 %s13, %s20
      %p22 = scmp.eq.s32.totalorder %s21, 0
      %s24 = sadd.s32 %s23, 1
      %s25 = scalar_select %p22, %s23, %s24
      %p28 = pneg %p22
      %p29 = scmp.eq.s32.totalorder %s13, 1
      %p30 = por %p28, %p29
      %p31 = scmp.ne.s32.totalorder %s23, %s26
      %p32 = scmp.eq.s32.totalorder %s13, 0
      %p33 = por %p31, %p32
      %p34 = scmp.ne.s32.totalorder %s23, %s26
      %p35 = scmp.eq.s32.totalorder %s18, 1
      %p36 = por %p34, %p35
      %p37 = scmp.ne.s32.totalorder %s26, %s27
      %p38 = scmp.eq.s32.totalorder %s18, 0
      %p39 = por %p37, %p38
      %p40 = scmp.ne.s32.totalorder %s26, %s27
      %p41 = scmp.eq.s32.totalorder %s19, 1
      %p42 = por %p40, %p41
      %p44 = scmp.ne.s32.totalorder %s27, %s43
      %p45 = scmp.eq.s32.totalorder %s19, 0
      %p46 = por %p44, %p45
      %s47 = ssub.s32 %s13, %s20
      %p48 = scmp.eq.s32.totalorder %s47, 0
      %s50 = sadd.s32 %s49, 1
      %s51 = scalar_select %p48, %s49, %s50
      %p54 = pneg %p48
      %p55 = scmp.eq.s32.totalorder %s13, 1
      %p56 = por %p54, %p55
      %p57 = scmp.ne.s32.totalorder %s49, %s52
      %p58 = scmp.eq.s32.totalorder %s13, 0
      %p59 = por %p57, %p58
      %p60 = scmp.ne.s32.totalorder %s49, %s52
      %p61 = scmp.eq.s32.totalorder %s18, 1
      %p62 = por %p60, %p61
      %p63 = scmp.ne.s32.totalorder %s52, %s53
      %p64 = scmp.eq.s32.totalorder %s18, 0
      %p65 = por %p63, %p64
      %p66 = scmp.ne.s32.totalorder %s52, %s53
      %p67 = scmp.eq.s32.totalorder %s19, 1
      %p68 = por %p66, %p67
      %p70 = scmp.ne.s32.totalorder %s53, %s69
      %p71 = scmp.eq.s32.totalorder %s19, 0
      %p72 = por %p70, %p71
      %s74 = sadd.s32 %s73, 1
      %p77 = scmp.eq.s32.totalorder %s13, 1
      %p78 = scmp.ne.s32.totalorder %s73, %s75
      %p79 = scmp.eq.s32.totalorder %s13, 0
      %p80 = por %p78, %p79
      %p81 = scmp.ne.s32.totalorder %s73, %s75
      %p82 = scmp.eq.s32.totalorder %s18, 1
      %p83 = por %p81, %p82
      %p84 = scmp.ne.s32.totalorder %s75, %s76
      %p85 = scmp.eq.s32.totalorder %s18, 0
      %p86 = por %p84, %p85
      %p87 = scmp.ne.s32.totalorder %s75, %s76
      %p88 = scmp.eq.s32.totalorder %s19, 1
      %p89 = por %p87, %p88
      %p91 = scmp.ne.s32.totalorder %s76, %s90
      %p92 = scmp.eq.s32.totalorder %s19, 0
      %p93 = por %p91, %p92
      %s95 = sadd.s32 %s94, 1
      %p98 = scmp.eq.s32.totalorder %s13, 1
      %p99 = scmp.ne.s32.totalorder %s94, %s96
      %p100 = scmp.eq.s32.totalorder %s13, 0
      %p101 = por %p99, %p100
      %p102 = scmp.ne.s32.totalorder %s94, %s96
      %p103 = scmp.eq.s32.totalorder %s18, 1
      %p104 = por %p102, %p103
      %p105 = scmp.ne.s32.totalorder %s96, %s97
      %p106 = scmp.eq.s32.totalorder %s18, 0
      %p107 = por %p105, %p106
      %p108 = scmp.ne.s32.totalorder %s96, %s97
      %p109 = scmp.eq.s32.totalorder %s19, 1
      %p110 = por %p108, %p109
      %p112 = scmp.ne.s32.totalorder %s97, %s111
      %p113 = scmp.eq.s32.totalorder %s19, 0
      %p114 = por %p112, %p113
      %s116 = sadd.s32 %s115, 1
      %p119 = scmp.eq.s32.totalorder %s13, 1
      %p120 = scmp.ne.s32.totalorder %s115, %s117
      %p121 = scmp.eq.s32.totalorder %s13, 0
      %p122 = por %p120, %p121
      %p123 = scmp.ne.s32.totalorder %s115, %s117
      %p124 = scmp.eq.s32.totalorder %s18, 1
      %p125 = por %p123, %p124
      %p126 = scmp.ne.s32.totalorder %s117, %s118
      %p127 = scmp.eq.s32.totalorder %s18, 0
      %p128 = por %p126, %p127
      %p129 = scmp.ne.s32.totalorder %s117, %s118
      %p130 = scmp.eq.s32.totalorder %s19, 1
      %p131 = por %p129, %p130
      %p133 = scmp.ne.s32.totalorder %s118, %s132
      %p134 = scmp.eq.s32.totalorder %s19, 0
      %p135 = por %p133, %p134
      %s137 = sadd.s32 %s136, 1
      %p140 = scmp.eq.s32.totalorder %s13, 1
      %p141 = scmp.ne.s32.totalorder %s136, %s138
      %p142 = scmp.eq.s32.totalorder %s13, 0
      %p143 = por %p141, %p142
      %p144 = scmp.ne.s32.totalorder %s136, %s138
      %p145 = scmp.eq.s32.totalorder %s18, 1
      %p146 = por %p144, %p145
      %p147 = scmp.ne.s32.totalorder %s138, %s139
      %p148 = scmp.eq.s32.totalorder %s18, 0
      %p149 = por %p147, %p148
      %p150 = scmp.ne.s32.totalorder %s138, %s139
      %p151 = scmp.eq.s32.totalorder %s19, 1
      %p152 = por %p150, %p151
      %p154 = scmp.ne.s32.totalorder %s139, %s153
      %p155 = scmp.eq.s32.totalorder %s19, 0
      %p156 = por %p154, %p155
      %s157 = ssub.s32 %s13, %s20
      %p158 = scmp.eq.s32.totalorder %s157, 0
      %s160 = sadd.s32 %s159, 1
      %s161 = scalar_select %p158, %s159, %s160
      %p164 = pneg %p158
      %p165 = scmp.eq.s32.totalorder %s13, 1
      %p166 = por %p164, %p165
      %p167 = scmp.ne.s32.totalorder %s159, %s162
      %p168 = scmp.eq.s32.totalorder %s13, 0
      %p169 = por %p167, %p168
      %p170 = scmp.ne.s32.totalorder %s159, %s162
      %p171 = scmp.eq.s32.totalorder %s18, 1
      %p172 = por %p170, %p171
      %p173 = scmp.ne.s32.totalorder %s162, %s163
      %p174 = scmp.eq.s32.totalorder %s18, 0
      %p175 = por %p173, %p174
      %p176 = scmp.ne.s32.totalorder %s162, %s163
      %p177 = scmp.eq.s32.totalorder %s19, 1
      %p178 = por %p176, %p177
      %p180 = scmp.ne.s32.totalorder %s163, %s179
      %p181 = scmp.eq.s32.totalorder %s19, 0
      %p182 = por %p180, %p181
      %p183 = scmp.le.s32.totalorder 1, %s13
      %p184 = scmp.lt.s32.totalorder %s13, 3
      %p185 = pnand %p183, %p184
      %p186 = pneg %p185
      // Predicated region
      $region9: #{tpu_custom_call.1} parent=5 // pred_check
        _
      $region10: #{tpu_custom_call.1} parent=5 // pred_check_branch
        %188 = sbr.rel (%p185) target = $region12
      $region11: #{tpu_custom_call.1} parent=5 // pred_region
        %s189 = ssub.s32 %s13, 1
        // Predicated region
        $region13: #{tpu_custom_call.1} parent=11 // pred_check
          %p190 = pneg %p86
        $region14: #{tpu_custom_call.1} parent=11 // pred_check_branch
          %192 = sbr.rel (%p190) target = $region16
        $region15: #{tpu_custom_call.1} parent=11 // pred_region
          _
        $region16: #{tpu_custom_call.1} parent=11 // pred_fallthru
          _
        // Predicated region
        $region17: #{tpu_custom_call.1} parent=11 // pred_check
          %p193 = pneg %p107
        $region18: #{tpu_custom_call.1} parent=11 // pred_check_branch
          %195 = sbr.rel (%p193) target = $region20
        $region19: #{tpu_custom_call.1} parent=11 // pred_region
          %s197 = ssub.s32 512, 512
          %198 = vsyncadd [#allocation3], %s197
          %s199 = sshll.u32 [#allocation2], 4
          %s200 = int_to_ptr.vmem [resolvable:$true] %s199
          %205 = dma.hbm_to_vmem [thread:$0]  %s3, 512, %s200, [#allocation3], 128, 128, 8
        $region20: #{tpu_custom_call.1} parent=11 // pred_fallthru
          _
        // Predicated region
        $region21: #{tpu_custom_call.1} parent=11 // pred_check
          %p206 = pneg %p128
        $region22: #{tpu_custom_call.1} parent=11 // pred_check_branch
          %208 = sbr.rel (%p206) target = $region24
        $region23: #{tpu_custom_call.1} parent=11 // pred_region
          _
        $region24: #{tpu_custom_call.1} parent=11 // pred_fallthru
          _
        // Predicated region
        $region25: #{tpu_custom_call.1} parent=11 // pred_check
          %p209 = pneg %p149
        $region26: #{tpu_custom_call.1} parent=11 // pred_check_branch
          %211 = sbr.rel (%p209) target = $region28
        $region27: #{tpu_custom_call.1} parent=11 // pred_region
          _
        $region28: #{tpu_custom_call.1} parent=11 // pred_fallthru
          _
      $region12: #{tpu_custom_call.1} parent=5 // pred_fallthru
        _
      %p212 = scmp.lt.s32.totalorder %s13, 2
      // Predicated region
      $region29: #{tpu_custom_call.1} parent=5 // pred_check
        %p213 = pneg %p212
      $region30: #{tpu_custom_call.1} parent=5 // pred_check_branch
        %215 = sbr.rel (%p213) target = $region32
      $region31: #{tpu_custom_call.1} parent=5 // pred_region
        // Predicated region
        $region33: #{tpu_custom_call.1} parent=31 // pred_check
          %p216 = pneg %p33
        $region34: #{tpu_custom_call.1} parent=31 // pred_check_branch
          %218 = sbr.rel (%p216) target = $region36
        $region35: #{tpu_custom_call.1} parent=31 // pred_region
          %s219 = smul.u32 2, %s13
          %p220 = scmp.lt.s32.totalorder %s219, 3
          %s221 = scalar_select %p220, %s219, 3
          %s222 = smul.addr %s221, 8
          %s223 = scalar_lea.vmem %s0, %s222
          %s224 = smul.u32 2, %s13
        $region36: #{tpu_custom_call.1} parent=31 // pred_fallthru
          _
        // Predicated region
        $region37: #{tpu_custom_call.1} parent=31 // pred_check
          %p225 = pneg %p59
        $region38: #{tpu_custom_call.1} parent=31 // pred_check_branch
          %227 = sbr.rel (%p225) target = $region40
        $region39: #{tpu_custom_call.1} parent=31 // pred_region
          %s228 = smul.u32 2, %s13
          %p229 = scmp.lt.s32.totalorder %s228, 3
          %s230 = scalar_select %p229, %s228, 3
          %s231 = smul.addr %s230, 8
          %s232 = scalar_lea.vmem %s1, %s231
          %s233 = smul.u32 2, %s13
        $region40: #{tpu_custom_call.1} parent=31 // pred_fallthru
          _
      $region32: #{tpu_custom_call.1} parent=5 // pred_fallthru
        _
      %p234 = scmp.le.s32.totalorder 1, %s13
      %p235 = scmp.lt.s32.totalorder %s13, 3
      %p236 = pnand %p234, %p235
      %p237 = pneg %p236
      // Predicated region
      $region41: #{tpu_custom_call.1} parent=5 // pred_check
        _
      $region42: #{tpu_custom_call.1} parent=5 // pred_check_branch
        %239 = sbr.rel (%p236) target = $region44
      $region43: #{tpu_custom_call.1} parent=5 // pred_region
        %s240 = ssub.s32 %s13, 1
        // Predicated region
        $region45: #{tpu_custom_call.1} parent=43 // pred_check
          %p241 = pneg %p107
        $region46: #{tpu_custom_call.1} parent=43 // pred_check_branch
          %243 = sbr.rel (%p241) target = $region48
        $region47: #{tpu_custom_call.1} parent=43 // pred_region
          %244 = dma.done [#allocation3], 512
        $region48: #{tpu_custom_call.1} parent=43 // pred_fallthru
          _
        %s245 = smul.u32 2, %s18
        %p246 = scmp.lt.s32.totalorder %s245, 3
        %s247 = scalar_select %p246, %s245, 3
        %s248 = smul.addr %s247, 8
        %s249 = scalar_lea.vmem %s0, %s248
        %p250 = pneg %p39
        %p251 = pneg %p36
        %s252 = smul.u32 2, %s18
        %p253 = scmp.lt.s32.totalorder %s252, 3
        %s254 = scalar_select %p253, %s252, 3
        %s255 = smul.addr %s254, 8
        %s256 = scalar_lea.vmem %s1, %s255
        %p257 = pneg %p65
        %p258 = pneg %p62
        %p259 = pneg %p86
        %p260 = pneg %p83
        %p261 = pneg %p107
        %p262 = pneg %p104
        %p263 = pneg %p128
        %p264 = pneg %p125
        %p265 = pneg %p149
        %p266 = pneg %p146
        %p267 = pneg %p175
        %p268 = pneg %p172
        %s269 = smul.u32 2, %s18
        %p270 = scmp.lt.s32.totalorder %s269, 3
        %s271 = scalar_select %p270, %s269, 3
        %s272 = smul.addr %s271, 8
        %s273 = scalar_lea.vmem %s6, %s272
        %s274 = smul.u32 2, %s18
        %p275 = scmp.lt.s32.totalorder %s274, 3
        %s276 = scalar_select %p275, %s274, 3
        %s277 = smul.addr %s276, 8
        %s278 = scalar_lea.vmem %s0, %s277
        %s279 = smul.u32 2, %s18
        %s280 = smul.u32 2, %s18
        %p281 = scmp.lt.s32.totalorder %s280, 3
        %s282 = scalar_select %p281, %s280, 3
        %s283 = smul.addr %s282, 8
        %s284 = scalar_lea.vmem %s1, %s283
        %s285 = smul.u32 2, %s18
        %s286 = smul.u32 2, %s18
        %p287 = scmp.lt.s32.totalorder %s286, 3
        %s288 = scalar_select %p287, %s286, 3
        %s289 = smul.addr %s288, 8
        %s290 = scalar_lea.vmem %s6, %s289
        %s291 = smul.u32 2, %s18
        %v292 = vld [vmem:[%s278] sm:$0xff]
        %v293 = vld [vmem:[%s278 + $0x8] sm:$0xff]
        %v294 = vlaneseq
        %v295 = vand.u32 %v294, 127
        %296 = vset.pattern.permute.xlu0 0
        %297 = vperm.xlu0 %296, %v292
        %v298 = vpop.permute.xlu0 %297
        %299 = vset.pattern.permute.xlu0 0
        %300 = vperm.xlu0 %299, %v293
        %v301 = vpop.permute.xlu0 %300
        %vm302 = vcmp.eq.s32.totalorder %v295, %v298
        %vm303 = vcmp.eq.s32.totalorder %v295, %v301
        %v304 = vsel %vm302, 1, 0
        %v305 = vsel %vm303, 1, 0
        %v306 = vcvt.s32.f32 %v304
        %v307 = vcvt.s32.f32 %v305
        %v308 = vld [vmem:[%s2] sm:$0xff]
        %v309 = vld [vmem:[%s2 + $0x8] sm:$0xff]
        %v310 = vld [vmem:[%s2 + $0x10] sm:$0xff]
        %v311 = vld [vmem:[%s2 + $0x18] sm:$0xff]
        %v312 = vld [vmem:[%s2 + $0x20] sm:$0xff]
        %v313 = vld [vmem:[%s2 + $0x28] sm:$0xff]
        %v314 = vld [vmem:[%s2 + $0x30] sm:$0xff]
        %v315 = vld [vmem:[%s2 + $0x38] sm:$0xff]
        %vm316 = vcmask 523264
        %v318 = vsel %vm316, %v306, 0
        %v321 = vsel %vm316, %v307, 0
        %323 = vmatprep.subr.mxu0 0.0
        %324 = vmatpush1.msra.mxu0 %v308
        %325 = vmatprep.subr.mxu0 0.0
        %326 = vmatpush1.msra.mxu0 %v309
        %327 = vmatprep.subr.mxu0 0.0
        %328 = vmatpush1.msra.mxu0 %v310
        %329 = vmatprep.subr.mxu0 0.0
        %330 = vmatpush1.msra.mxu0 %v311
        %331 = vmatprep.subr.mxu0 0.0
        %332 = vmatpush1.msra.mxu0 %v312
        %333 = vmatprep.subr.mxu0 0.0
        %334 = vmatpush1.msra.mxu0 %v313
        %335 = vmatprep.subr.mxu0 0.0
        %336 = vmatpush1.msra.mxu0 %v314
        %337 = vmatprep.subr.mxu0 0.0
        %338 = vmatpush1.msra.mxu0 %v315
        %339 = vmatprep.subr.mxu0 0.0
        %340 = vmatpush1.msra.mxu0 0.0
        %341 = vmatprep.subr.mxu0 0.0
        %342 = vmatpush1.msra.mxu0 0.0
        %343 = vmatprep.subr.mxu0 0.0
        %344 = vmatpush1.msra.mxu0 0.0
        %345 = vmatprep.subr.mxu0 0.0
        %346 = vmatpush1.msra.mxu0 0.0
        %347 = vmatprep.subr.mxu0 0.0
        %348 = vmatpush1.msra.mxu0 0.0
        %349 = vmatprep.subr.mxu0 0.0
        %350 = vmatpush1.msra.mxu0 0.0
        %351 = vmatprep.subr.mxu0 0.0
        %352 = vmatpush1.msra.mxu0 0.0
        %353 = vmatprep.subr.mxu0 0.0
        %354 = vmatpush1.msra.mxu0 0.0
        %355 = vmatprep.subr.mxu0 0.0
        %356 = vmatpush1.msra.mxu0 0.0
        %357 = vmatprep.subr.mxu0 0.0
        %358 = vmatpush1.msra.mxu0 0.0
        %359 = vmatprep.subr.mxu0 0.0
        %360 = vmatpush1.msra.mxu0 0.0
        %361 = vmatprep.subr.mxu0 0.0
        %362 = vmatpush1.msra.mxu0 0.0
        %363 = vmatprep.subr.mxu0 0.0
        %364 = vmatpush1.msra.mxu0 0.0
        %365 = vmatprep.subr.mxu0 0.0
        %366 = vmatpush1.msra.mxu0 0.0
        %367 = vmatprep.subr.mxu0 0.0
        %368 = vmatpush1.msra.mxu0 0.0
        %369 = vmatprep.subr.mxu0 0.0
        %370 = vmatpush1.msra.mxu0 0.0
        %371 = vmatprep.subr.mxu0 0.0
        %372 = vmatpush1.msra.mxu0 0.0
        %373 = vmatprep.subr.mxu0 0.0
        %374 = vmatpush1.msra.mxu0 0.0
        %375 = vmatprep.subr.mxu0 0.0
        %376 = vmatpush1.msra.mxu0 0.0
        %377 = vmatprep.subr.mxu0 0.0
        %378 = vmatpush1.msra.mxu0 0.0
        %379 = vmatprep.subr.mxu0 0.0
        %380 = vmatpush1.msra.mxu0 0.0
        %381 = vmatprep.subr.mxu0 0.0
        %382 = vmatpush1.msra.mxu0 0.0
        %383 = vmatprep.subr.mxu0 0.0
        %384 = vmatpush1.msra.mxu0 0.0
        %385 = vmatprep.subr.mxu0 0.0
        %386 = vmatpush1.msra.mxu0 0.0
        %387 = vmatprep.mubr.f32.mxu0 0.0
        %388 = vmatmul.mubr.f32.gmra.mrb[0].mxu0 %v318
        %v389 = vpop.f32.mrb[0].mxu0
        %v390 = vadd.f32 0.0, %v389
        %v391 = vpop.f32.mrb[0].mxu0
        %392 = vmatprep.mubr.f32.mxu0 0.0
        %393 = vmatmul.mubr.f32.gmra.mrb[0].mxu0 %v321
        %v394 = vpop.f32.mrb[0].mxu0
        %v395 = vadd.f32 0.0, %v394
        %v396 = vpop.f32.mrb[0].mxu0
        %397 = vdwg.mxu0
        %v398 = vld [vmem:[%s284] sm:$0xff]
        %v399 = vld [vmem:[%s284 + $0x8] sm:$0xff]
        %400 = vset.pattern.permute.xlu0 0
        %401 = vperm.xlu0 %400, %v398
        %v402 = vpop.permute.xlu0 %401
        %403 = vset.pattern.permute.xlu0 0
        %404 = vperm.xlu0 %403, %v399
        %v405 = vpop.permute.xlu0 %404
        %vm406 = vcmp.eq.s32.totalorder %v295, %v402
        %vm407 = vcmp.eq.s32.totalorder %v295, %v405
        %v408 = vsel %vm406, 1, 0
        %v409 = vsel %vm407, 1, 0
        %v410 = vcvt.s32.f32 %v408
        %v411 = vcvt.s32.f32 %v409
        %v412 = vld [vmem:[#allocation2] sm:$0xff]
        %v413 = vld [vmem:[#allocation2 + $0x8] sm:$0xff]
        %v414 = vld [vmem:[#allocation2 + $0x10] sm:$0xff]
        %v415 = vld [vmem:[#allocation2 + $0x18] sm:$0xff]
        %vm416 = vcmask 261120
        %v418 = vsel %vm416, %v410, 0
        %v421 = vsel %vm416, %v411, 0
        %423 = vmatprep.subr.mxu0 0.0
        %424 = vmatpush1.msra.mxu0 %v412
        %425 = vmatprep.subr.mxu0 0.0
        %426 = vmatpush1.msra.mxu0 %v413
        %427 = vmatprep.subr.mxu0 0.0
        %428 = vmatpush1.msra.mxu0 %v414
        %429 = vmatprep.subr.mxu0 0.0
        %430 = vmatpush1.msra.mxu0 %v415
        %431 = vmatprep.subr.mxu0 0.0
        %432 = vmatpush1.msra.mxu0 0.0
        %433 = vmatprep.subr.mxu0 0.0
        %434 = vmatpush1.msra.mxu0 0.0
        %435 = vmatprep.subr.mxu0 0.0
        %436 = vmatpush1.msra.mxu0 0.0
        %437 = vmatprep.subr.mxu0 0.0
        %438 = vmatpush1.msra.mxu0 0.0
        %439 = vmatprep.subr.mxu0 0.0
        %440 = vmatpush1.msra.mxu0 0.0
        %441 = vmatprep.subr.mxu0 0.0
        %442 = vmatpush1.msra.mxu0 0.0
        %443 = vmatprep.subr.mxu0 0.0
        %444 = vmatpush1.msra.mxu0 0.0
        %445 = vmatprep.subr.mxu0 0.0
        %446 = vmatpush1.msra.mxu0 0.0
        %447 = vmatprep.subr.mxu0 0.0
        %448 = vmatpush1.msra.mxu0 0.0
        %449 = vmatprep.subr.mxu0 0.0
        %450 = vmatpush1.msra.mxu0 0.0
        %451 = vmatprep.subr.mxu0 0.0
        %452 = vmatpush1.msra.mxu0 0.0
        %453 = vmatprep.subr.mxu0 0.0
        %454 = vmatpush1.msra.mxu0 0.0
        %455 = vmatprep.subr.mxu0 0.0
        %456 = vmatpush1.msra.mxu0 0.0
        %457 = vmatprep.subr.mxu0 0.0
        %458 = vmatpush1.msra.mxu0 0.0
        %459 = vmatprep.subr.mxu0 0.0
        %460 = vmatpush1.msra.mxu0 0.0
        %461 = vmatprep.subr.mxu0 0.0
        %462 = vmatpush1.msra.mxu0 0.0
        %463 = vmatprep.subr.mxu0 0.0
        %464 = vmatpush1.msra.mxu0 0.0
        %465 = vmatprep.subr.mxu0 0.0
        %466 = vmatpush1.msra.mxu0 0.0
        %467 = vmatprep.subr.mxu0 0.0
        %468 = vmatpush1.msra.mxu0 0.0
        %469 = vmatprep.subr.mxu0 0.0
        %470 = vmatpush1.msra.mxu0 0.0
        %471 = vmatprep.subr.mxu0 0.0
        %472 = vmatpush1.msra.mxu0 0.0
        %473 = vmatprep.subr.mxu0 0.0
        %474 = vmatpush1.msra.mxu0 0.0
        %475 = vmatprep.subr.mxu0 0.0
        %476 = vmatpush1.msra.mxu0 0.0
        %477 = vmatprep.subr.mxu0 0.0
        %478 = vmatpush1.msra.mxu0 0.0
        %479 = vmatprep.subr.mxu0 0.0
        %480 = vmatpush1.msra.mxu0 0.0
        %481 = vmatprep.subr.mxu0 0.0
        %482 = vmatpush1.msra.mxu0 0.0
        %483 = vmatprep.subr.mxu0 0.0
        %484 = vmatpush1.msra.mxu0 0.0
        %485 = vmatprep.subr.mxu0 0.0
        %486 = vmatpush1.msra.mxu0 0.0
        %487 = vmatprep.mubr.f32.mxu0 0.0
        %488 = vmatmul.mubr.f32.gmra.mrb[0].mxu0 %v418
        %v489 = vpop.f32.mrb[0].mxu0
        %v490 = vadd.f32 0.0, %v489
        %v491 = vpop.f32.mrb[0].mxu0
        %492 = vmatprep.mubr.f32.mxu0 0.0
        %493 = vmatmul.mubr.f32.gmra.mrb[0].mxu0 %v421
        %v494 = vpop.f32.mrb[0].mxu0
        %v495 = vadd.f32 0.0, %v494
        %v496 = vpop.f32.mrb[0].mxu0
        %497 = vdwg.mxu0
        %v498 = vld [vmem:[%s4] sm:$0xff]
        %v499 = vld [vmem:[%s4 + $0x8] sm:$0xff]
        %v500 = vld [vmem:[%s4 + $0x10] sm:$0xff]
        %v501 = vld [vmem:[%s4 + $0x18] sm:$0xff]
        %v502 = vld [vmem:[%s4 + $0x20] sm:$0xff]
        %v503 = vld [vmem:[%s4 + $0x28] sm:$0xff]
        %v504 = vld [vmem:[%s4 + $0x30] sm:$0xff]
        %v505 = vld [vmem:[%s4 + $0x38] sm:$0xff]
        %v506 = vld [vmem:[%s4 + $0x40] sm:$0xff]
        %v507 = vld [vmem:[%s4 + $0x48] sm:$0xff]
        %v508 = vld [vmem:[%s4 + $0x50] sm:$0xff]
        %v509 = vld [vmem:[%s4 + $0x58] sm:$0xff]
        %v510 = vld [vmem:[%s4 + $0x60] sm:$0xff]
        %v511 = vld [vmem:[%s4 + $0x68] sm:$0xff]
        %v512 = vld [vmem:[%s4 + $0x70] sm:$0xff]
        %v513 = vld [vmem:[%s4 + $0x78] sm:$0xff]
        %v514 = vld [vmem:[%s4 + $0x80] sm:$0xff]
        %v515 = vld [vmem:[%s4 + $0x88] sm:$0xff]
        %v516 = vld [vmem:[%s4 + $0x90] sm:$0xff]
        %v517 = vld [vmem:[%s4 + $0x98] sm:$0xff]
        %v518 = vld [vmem:[%s4 + $0xa0] sm:$0xff]
        %v519 = vld [vmem:[%s4 + $0xa8] sm:$0xff]
        %v520 = vld [vmem:[%s4 + $0xb0] sm:$0xff]
        %v521 = vld [vmem:[%s4 + $0xb8] sm:$0xff]
        %v522 = vld [vmem:[%s4 + $0xc0] sm:$0xff]
        %v523 = vld [vmem:[%s4 + $0xc8] sm:$0xff]
        %v524 = vld [vmem:[%s4 + $0xd0] sm:$0xff]
        %v525 = vld [vmem:[%s4 + $0xd8] sm:$0xff]
        %v526 = vld [vmem:[%s4 + $0xe0] sm:$0xff]
        %v527 = vld [vmem:[%s4 + $0xe8] sm:$0xff]
        %v528 = vld [vmem:[%s4 + $0xf0] sm:$0xff]
        %v529 = vld [vmem:[%s4 + $0xf8] sm:$0xff]
        %530 = vmatprep.subr.mxu0 %v499
        %531 = vmatpush1.msra.mxu0 %v498
        %532 = vmatprep.subr.mxu0 %v501
        %533 = vmatpush1.msra.mxu0 %v500
        %534 = vmatprep.subr.mxu0 %v503
        %535 = vmatpush1.msra.mxu0 %v502
        %536 = vmatprep.subr.mxu0 %v505
        %537 = vmatpush1.msra.mxu0 %v504
        %538 = vmatprep.subr.mxu0 %v507
        %539 = vmatpush1.msra.mxu0 %v506
        %540 = vmatprep.subr.mxu0 %v509
        %541 = vmatpush1.msra.mxu0 %v508
        %542 = vmatprep.subr.mxu0 %v511
        %543 = vmatpush1.msra.mxu0 %v510
        %544 = vmatprep.subr.mxu0 %v513
        %545 = vmatpush1.msra.mxu0 %v512
        %546 = vmatprep.subr.mxu0 %v515
        %547 = vmatpush1.msra.mxu0 %v514
        %548 = vmatprep.subr.mxu0 %v517
        %549 = vmatpush1.msra.mxu0 %v516
        %550 = vmatprep.subr.mxu0 %v519
        %551 = vmatpush1.msra.mxu0 %v518
        %552 = vmatprep.subr.mxu0 %v521
        %553 = vmatpush1.msra.mxu0 %v520
        %554 = vmatprep.subr.mxu0 %v523
        %555 = vmatpush1.msra.mxu0 %v522
        %556 = vmatprep.subr.mxu0 %v525
        %557 = vmatpush1.msra.mxu0 %v524
        %558 = vmatprep.subr.mxu0 %v527
        %559 = vmatpush1.msra.mxu0 %v526
        %560 = vmatprep.subr.mxu0 %v529
        %561 = vmatpush1.msra.mxu0 %v528
        %562 = vmatprep.subr.mxu0 0.0
        %563 = vmatpush1.msra.mxu0 0.0
        %564 = vmatprep.subr.mxu0 0.0
        %565 = vmatpush1.msra.mxu0 0.0
        %566 = vmatprep.subr.mxu0 0.0
        %567 = vmatpush1.msra.mxu0 0.0
        %568 = vmatprep.subr.mxu0 0.0
        %569 = vmatpush1.msra.mxu0 0.0
        %570 = vmatprep.subr.mxu0 0.0
        %571 = vmatpush1.msra.mxu0 0.0
        %572 = vmatprep.subr.mxu0 0.0
        %573 = vmatpush1.msra.mxu0 0.0
        %574 = vmatprep.subr.mxu0 0.0
        %575 = vmatpush1.msra.mxu0 0.0
        %576 = vmatprep.subr.mxu0 0.0
        %577 = vmatpush1.msra.mxu0 0.0
        %578 = vmatprep.subr.mxu0 0.0
        %579 = vmatpush1.msra.mxu0 0.0
        %580 = vmatprep.subr.mxu0 0.0
        %581 = vmatpush1.msra.mxu0 0.0
        %582 = vmatprep.subr.mxu0 0.0
        %583 = vmatpush1.msra.mxu0 0.0
        %584 = vmatprep.subr.mxu0 0.0
        %585 = vmatpush1.msra.mxu0 0.0
        %586 = vmatprep.subr.mxu0 0.0
        %587 = vmatpush1.msra.mxu0 0.0
        %588 = vmatprep.subr.mxu0 0.0
        %589 = vmatpush1.msra.mxu0 0.0
        %590 = vmatprep.subr.mxu0 0.0
        %591 = vmatpush1.msra.mxu0 0.0
        %592 = vmatprep.subr.mxu0 0.0
        %593 = vmatpush1.msra.mxu0 0.0
        %594 = vmatprep.mubr.f32.mxu0 0.0
        %595 = vmatmul.mubr.f32.gmra.mrb[0].mxu0 %v390
        %v596 = vpop.f32.mrb[0].mxu0
        %v597 = vadd.f32 0.0, %v596
        %v598 = vpop.f32.mrb[0].mxu0
        %v599 = vadd.f32 0.0, %v598
        %600 = vmatprep.mubr.f32.mxu0 0.0
        %601 = vmatmul.mubr.f32.gmra.mrb[0].mxu0 %v395
        %v602 = vpop.f32.mrb[0].mxu0
        %v603 = vadd.f32 0.0, %v602
        %v604 = vpop.f32.mrb[0].mxu0
        %v605 = vadd.f32 0.0, %v604
        %606 = vdwg.mxu0
        %v607 = vmul.f32 %v597, %v490
        %v608 = vmul.f32 %v603, %v495
        %v609 = vmul.f32 %v599, %v490
        %v610 = vmul.f32 %v605, %v495
        %v611 = vld [vmem:[%s5] sm:$0xff]
        %v612 = vld [vmem:[%s5 + $0x8] sm:$0xff]
        %v613 = vld [vmem:[%s5 + $0x10] sm:$0xff]
        %v614 = vld [vmem:[%s5 + $0x18] sm:$0xff]
        %v615 = vld [vmem:[%s5 + $0x20] sm:$0xff]
        %v616 = vld [vmem:[%s5 + $0x28] sm:$0xff]
        %v617 = vld [vmem:[%s5 + $0x30] sm:$0xff]
        %v618 = vld [vmem:[%s5 + $0x38] sm:$0xff]
        %v619 = vld [vmem:[%s5 + $0x40] sm:$0xff]
        %v620 = vld [vmem:[%s5 + $0x48] sm:$0xff]
        %v621 = vld [vmem:[%s5 + $0x50] sm:$0xff]
        %v622 = vld [vmem:[%s5 + $0x58] sm:$0xff]
        %v623 = vld [vmem:[%s5 + $0x60] sm:$0xff]
        %v624 = vld [vmem:[%s5 + $0x68] sm:$0xff]
        %v625 = vld [vmem:[%s5 + $0x70] sm:$0xff]
        %v626 = vld [vmem:[%s5 + $0x78] sm:$0xff]
        %v627 = vld [vmem:[%s5 + $0x80] sm:$0xff]
        %v628 = vld [vmem:[%s5 + $0x88] sm:$0xff]
        %v629 = vld [vmem:[%s5 + $0x90] sm:$0xff]
        %v630 = vld [vmem:[%s5 + $0x98] sm:$0xff]
        %v631 = vld [vmem:[%s5 + $0xa0] sm:$0xff]
        %v632 = vld [vmem:[%s5 + $0xa8] sm:$0xff]
        %v633 = vld [vmem:[%s5 + $0xb0] sm:$0xff]
        %v634 = vld [vmem:[%s5 + $0xb8] sm:$0xff]
        %v635 = vld [vmem:[%s5 + $0xc0] sm:$0xff]
        %v636 = vld [vmem:[%s5 + $0xc8] sm:$0xff]
        %v637 = vld [vmem:[%s5 + $0xd0] sm:$0xff]
        %v638 = vld [vmem:[%s5 + $0xd8] sm:$0xff]
        %v639 = vld [vmem:[%s5 + $0xe0] sm:$0xff]
        %v640 = vld [vmem:[%s5 + $0xe8] sm:$0xff]
        %v641 = vld [vmem:[%s5 + $0xf0] sm:$0xff]
        %v642 = vld [vmem:[%s5 + $0xf8] sm:$0xff]
        %643 = vmatprep.subr.mxu0 0.0
        %644 = vmatpush1.msra.mxu0 %v611
        %645 = vmatprep.subr.mxu0 0.0
        %646 = vmatpush1.msra.mxu0 %v612
        %647 = vmatprep.subr.mxu0 0.0
        %648 = vmatpush1.msra.mxu0 %v613
        %649 = vmatprep.subr.mxu0 0.0
        %650 = vmatpush1.msra.mxu0 %v614
        %651 = vmatprep.subr.mxu0 0.0
        %652 = vmatpush1.msra.mxu0 %v615
        %653 = vmatprep.subr.mxu0 0.0
        %654 = vmatpush1.msra.mxu0 %v616
        %655 = vmatprep.subr.mxu0 0.0
        %656 = vmatpush1.msra.mxu0 %v617
        %657 = vmatprep.subr.mxu0 0.0
        %658 = vmatpush1.msra.mxu0 %v618
        %659 = vmatprep.subr.mxu0 0.0
        %660 = vmatpush1.msra.mxu0 %v619
        %661 = vmatprep.subr.mxu0 0.0
        %662 = vmatpush1.msra.mxu0 %v620
        %663 = vmatprep.subr.mxu0 0.0
        %664 = vmatpush1.msra.mxu0 %v621
        %665 = vmatprep.subr.mxu0 0.0
        %666 = vmatpush1.msra.mxu0 %v622
        %667 = vmatprep.subr.mxu0 0.0
        %668 = vmatpush1.msra.mxu0 %v623
        %669 = vmatprep.subr.mxu0 0.0
        %670 = vmatpush1.msra.mxu0 %v624
        %671 = vmatprep.subr.mxu0 0.0
        %672 = vmatpush1.msra.mxu0 %v625
        %673 = vmatprep.subr.mxu0 0.0
        %674 = vmatpush1.msra.mxu0 %v626
        %675 = vmatprep.subr.mxu0 0.0
        %676 = vmatpush1.msra.mxu0 %v627
        %677 = vmatprep.subr.mxu0 0.0
        %678 = vmatpush1.msra.mxu0 %v628
        %679 = vmatprep.subr.mxu0 0.0
        %680 = vmatpush1.msra.mxu0 %v629
        %681 = vmatprep.subr.mxu0 0.0
        %682 = vmatpush1.msra.mxu0 %v630
        %683 = vmatprep.subr.mxu0 0.0
        %684 = vmatpush1.msra.mxu0 %v631
        %685 = vmatprep.subr.mxu0 0.0
        %686 = vmatpush1.msra.mxu0 %v632
        %687 = vmatprep.subr.mxu0 0.0
        %688 = vmatpush1.msra.mxu0 %v633
        %689 = vmatprep.subr.mxu0 0.0
        %690 = vmatpush1.msra.mxu0 %v634
        %691 = vmatprep.subr.mxu0 0.0
        %692 = vmatpush1.msra.mxu0 %v635
        %693 = vmatprep.subr.mxu0 0.0
        %694 = vmatpush1.msra.mxu0 %v636
        %695 = vmatprep.subr.mxu0 0.0
        %696 = vmatpush1.msra.mxu0 %v637
        %697 = vmatprep.subr.mxu0 0.0
        %698 = vmatpush1.msra.mxu0 %v638
        %699 = vmatprep.subr.mxu0 0.0
        %700 = vmatpush1.msra.mxu0 %v639
        %701 = vmatprep.subr.mxu0 0.0
        %702 = vmatpush1.msra.mxu0 %v640
        %703 = vmatprep.subr.mxu0 0.0
        %704 = vmatpush1.msra.mxu0 %v641
        %705 = vmatprep.subr.mxu0 0.0
        %706 = vmatpush1.msra.mxu0 %v642
        %707 = vmatprep.mubr.f32.mxu0 %v609
        %708 = vmatmul.mubr.f32.gmra.mrb[0].mxu0 %v607
        %v709 = vpop.f32.mrb[0].mxu0
        %v710 = vadd.f32 0.0, %v709
        %v711 = vpop.f32.mrb[0].mxu0
        %712 = vmatprep.mubr.f32.mxu0 %v610
        %713 = vmatmul.mubr.f32.gmra.mrb[0].mxu0 %v608
        %v714 = vpop.f32.mrb[0].mxu0
        %v715 = vadd.f32 0.0, %v714
        %v716 = vpop.f32.mrb[0].mxu0
        %717 = vdwg.mxu0
        %v718 = vmax.f32 %v710, 0.0
        %v719 = vmax.f32 %v715, 0.0
        %vm720 = vcmask 15360
        %721 = vst.msk [vmem:[%s290] sm:$0xff] %vm720, %v718
        %722 = vst.msk [vmem:[%s290 + $0x8] sm:$0xff] %vm720, %v719
        %s723 = smul.u32 2, %s18
        %p724 = scmp.lt.s32.totalorder %s723, 3
        %s725 = scalar_select %p724, %s723, 3
        %s726 = smul.addr %s725, 8
        %s727 = scalar_lea.vmem %s6, %s726
        // Predicated region
        $region49: #{tpu_custom_call.1} parent=43 // pred_check
          %p728 = pneg %p172
        $region50: #{tpu_custom_call.1} parent=43 // pred_check_branch
          %730 = sbr.rel (%p728) target = $region52
        $region51: #{tpu_custom_call.1} parent=43 // pred_region
          %s731 = smul.u32 2, %s18
        $region52: #{tpu_custom_call.1} parent=43 // pred_fallthru
          _
      $region44: #{tpu_custom_call.1} parent=5 // pred_fallthru
        _
      %p732 = scmp.le.s32.totalorder 2, %s13
      // Predicated region
      $region53: #{tpu_custom_call.1} parent=5 // pred_check
        %p733 = pneg %p732
      $region54: #{tpu_custom_call.1} parent=5 // pred_check_branch
        %735 = sbr.rel (%p733) target = $region56
      $region55: #{tpu_custom_call.1} parent=5 // pred_region
        %s736 = ssub.s32 %s13, 2
        // Predicated region
        $region57: #{tpu_custom_call.1} parent=55 // pred_check
          %p737 = pneg %p178
        $region58: #{tpu_custom_call.1} parent=55 // pred_check_branch
          %739 = sbr.rel (%p737) target = $region60
        $region59: #{tpu_custom_call.1} parent=55 // pred_region
          %s740 = smul.u32 2, %s19
          %p741 = scmp.lt.s32.totalorder %s740, 3
          %s742 = scalar_select %p741, %s740, 3
          %s743 = smul.addr %s742, 8
          %s744 = scalar_lea.vmem %s6, %s743
        $region60: #{tpu_custom_call.1} parent=55 // pred_fallthru
          _
      $region56: #{tpu_custom_call.1} parent=5 // pred_fallthru
        _
    $region6: #{tpu_custom_call.1} parent=1 // loop_footer
      %s17 = sadd.s32 1, %s13
    $region7: #{tpu_custom_call.1} parent=1 // loop_footer_branch
      %12 = sbr.rel target = $region3
    $region8: #{tpu_custom_call.1} parent=1 // loop_exit
      _
    %745 = vsyncpa [#allocation3], 1
    %s746 = scalar_lea.sflag [#allocation3], 1
    %747 = vsyncpa %s746, 1

</llo_original>
